<compile_context>
chip_gen: v7x
topology: tpu7x:2x2x1
jax: 0.10.0
libtpu: 0.0.40
codegen_flags: <defaults>
</compile_context>

<pallas_src>
import functools

import jax
import jax.numpy as jnp
from jax import lax
from jax.experimental import pallas as pl
from jax.experimental.pallas import tpu as pltpu


# ----------------------------------------------------------------------------
# Tile helper: largest tile <= target that divides dim and is a multiple of
# `align`; otherwise fall back to the full dim (full-extent blocks are legal).
# ----------------------------------------------------------------------------
def _pick_tile(dim, target, align):
    if dim <= target:
        return dim
    t = (target // align) * align
    while t >= align:
        if dim % t == 0:
            return t
        t -= align
    return dim


# ----------------------------------------------------------------------------
# Tiled linear:  y = x @ w + b
# ----------------------------------------------------------------------------
def _linear_kernel(x_ref, w_ref, b_ref, o_ref, acc_ref):
    k = pl.program_id(2)

    @pl.when(k == 0)
    def _():
        acc_ref[...] = jnp.zeros_like(acc_ref)

    acc_ref[...] += jnp.dot(x_ref[...], w_ref[...],
                            preferred_element_type=jnp.float32)

    @pl.when(k == pl.num_programs(2) - 1)
    def _():
        o_ref[...] = (acc_ref[...] + b_ref[...].astype(jnp.float32)
                      ).astype(o_ref.dtype)


def linear_pallas(x2d, w, b, *, tm=512, tn=512, tk=512):
    """y = x2d @ w + b.  x2d: (M, K), w: (K, Nout), b: (Nout,)."""
    M, K = x2d.shape
    Kw, Nout = w.shape
    assert K == Kw
    tm = _pick_tile(M, tm, 8)
    tn = _pick_tile(Nout, tn, 128)
    tk = _pick_tile(K, tk, 128)
    b2d = b.reshape(1, Nout)

    return pl.pallas_call(
        _linear_kernel,
        out_shape=jax.ShapeDtypeStruct((M, Nout), x2d.dtype),
        grid_spec=pltpu.PrefetchScalarGridSpec(
            num_scalar_prefetch=0,
            grid=(M // tm, Nout // tn, K // tk),
            in_specs=[
                pl.BlockSpec((tm, tk), lambda i, j, k: (i, k)),
                pl.BlockSpec((tk, tn), lambda i, j, k: (k, j)),
                pl.BlockSpec((1, tn), lambda i, j, k: (0, j)),
            ],
            out_specs=pl.BlockSpec((tm, tn), lambda i, j, k: (i, j)),
            scratch_shapes=[pltpu.VMEM((tm, tn), jnp.float32)],
        ),
        compiler_params=pltpu.CompilerParams(
            dimension_semantics=("parallel", "parallel", "arbitrary"),
            vmem_limit_bytes=48 * 1024 * 1024),
    )(x2d, w, b2d)


# ----------------------------------------------------------------------------
# Flash-style multi-head attention.
#   grid = (batch, q_tiles, kv_tiles); per-head online softmax with running
#   max/sum stats and a merged (tq, E) f32 accumulator ('n (h d)' layout),
#   finalized into a single lane-dense (1, tq, E) store.
# ----------------------------------------------------------------------------
def _mha_flash_kernel(q_ref, k_ref, v_ref, o_ref,
                      m_ref, l_ref, acc_ref,
                      *, num_heads, head_dim, col_off):
    ki = pl.program_id(2)
    H, D = num_heads, head_dim
    qo, ko, vo = col_off
    dn = (((1,), (1,)), ((), ()))  # (tq, D) x (tkv, D) contract D -> (tq, tkv)

    @pl.when(ki == 0)
    def _():
        m_ref[...] = jnp.full_like(m_ref, -jnp.inf)
        l_ref[...] = jnp.zeros_like(l_ref)
        acc_ref[...] = jnp.zeros_like(acc_ref)

    # Static head loop (H is small); live ranges are bounded per head because
    # each head's partial result is committed to the m/l/acc VMEM scratch
    # before the next head.  (A fori_loop would need dynamic lane slicing at
    # non-128-multiple offsets, which is worse than the unroll for small H.)
    for h in range(H):
        q = q_ref[0, :, qo + h * D: qo + (h + 1) * D]          # (tq, D)
        k = k_ref[0, :, ko + h * D: ko + (h + 1) * D]          # (tkv, D)
        v = v_ref[0, :, vo + h * D: vo + (h + 1) * D]          # (tkv, D)

        # scores = einsum('qd,kd->qk') without materializing k.T
        s = lax.dot_general(q, k, dimension_numbers=dn,
                            preferred_element_type=jnp.float32)  # (tq, tkv)

        m_prev = m_ref[h]                                       # (tq, 1)
        m_new = jnp.maximum(m_prev, jnp.max(s, axis=-1, keepdims=True))
        alpha = jnp.exp(m_prev - m_new)
        p = jnp.exp(s - m_new)
        l_ref[h] = alpha * l_ref[h] + jnp.sum(p, axis=-1, keepdims=True)
        m_ref[h] = m_new

        # probs cast to v's dtype for the MXU, f32 accumulation; head h lands
        # in its own column block of the merged accumulator.
        pv = jnp.dot(p.astype(v.dtype), v,
                     preferred_element_type=jnp.float32)        # (tq, D)
        acc_ref[:, h * D:(h + 1) * D] = (
            alpha * acc_ref[:, h * D:(h + 1) * D] + pv)

    @pl.when(ki == pl.num_programs(2) - 1)
    def _():
        for h in range(H):
            inv_l = pl.reciprocal(l_ref[h], approx=True)        # EUP slot
            acc_ref[:, h * D:(h + 1) * D] = acc_ref[:, h * D:(h + 1) * D] * inv_l
        # Single full-width lane-dense store (head merge already done).
        o_ref[0] = acc_ref[...].astype(o_ref.dtype)


def attention_pallas(qkv3, num_heads, *, tq_target=256, tkv_target=512):
    """qkv3: (B, N, 3E) with (qkv, head, d)-contiguous columns -> (B, N, E)."""
    B, N, threeE = qkv3.shape
    E = threeE // 3
    D = E // num_heads
    tq = _pick_tile(N, tq_target, 8)
    tkv = _pick_tile(N, tkv_target, 8)

    if E % 128 == 0:
        # Q / K / V selected as E-wide lane blocks (block index 0 / 1 / 2) of
        # the column-permuted projection -- no HBM transpose or split.
        q_spec = pl.BlockSpec((1, tq, E), lambda b, qi, ki: (b, qi, 0))
        k_spec = pl.BlockSpec((1, tkv, E), lambda b, qi, ki: (b, ki, 1))
        v_spec = pl.BlockSpec((1, tkv, E), lambda b, qi, ki: (b, ki, 2))
        col_off = (0, 0, 0)
    else:
        # Lane-alignment fallback (e.g. emb_size=248): full 3E-wide blocks,
        # Q/K/V column ranges sliced statically in-kernel.
        # TODO(synk): pad E to a multiple of 128 instead of re-streaming the
        #             unused column thirds of each row block.
        q_spec = pl.BlockSpec((1, tq, threeE), lambda b, qi, ki: (b, qi, 0))
        k_spec = pl.BlockSpec((1, tkv, threeE), lambda b, qi, ki: (b, ki, 0))
        v_spec = pl.BlockSpec((1, tkv, threeE), lambda b, qi, ki: (b, ki, 0))
        col_off = (0, E, 2 * E)

    kernel = functools.partial(_mha_flash_kernel, num_heads=num_heads,
                               head_dim=D, col_off=col_off)
    return pl.pallas_call(
        kernel,
        out_shape=jax.ShapeDtypeStruct((B, N, E), qkv3.dtype),
        grid_spec=pltpu.PrefetchScalarGridSpec(
            num_scalar_prefetch=0,
            grid=(B, N // tq, N // tkv),
            in_specs=[q_spec, k_spec, v_spec],
            out_specs=pl.BlockSpec((1, tq, E), lambda b, qi, ki: (b, qi, 0)),
            scratch_shapes=[
                pltpu.VMEM((num_heads, tq, 1), jnp.float32),   # running max
                pltpu.VMEM((num_heads, tq, 1), jnp.float32),   # running sum
                pltpu.VMEM((tq, E), jnp.float32),              # merged acc
            ],
        ),
        compiler_params=pltpu.CompilerParams(
            dimension_semantics=("parallel", "parallel", "arbitrary"),
            vmem_limit_bytes=48 * 1024 * 1024),
    )(qkv3, qkv3, qkv3)


# ----------------------------------------------------------------------------
# One-time parameter preparation + full module forward
# ----------------------------------------------------------------------------
def prepare_params(params, num_heads):
    """One-time prep: (qkv, head, d)-contiguous qkv columns (replaces the
    'b n (h d qkv) -> qkv b h n d' rearrange) and the post-softmax 1/sqrt(E)
    scale folded into the output projection weight."""
    threeE = params["w_qkv"].shape[1]
    E = threeE // 3
    H = num_heads
    D = E // H
    inv_scaling = 1.0 / (float(E) ** 0.5)
    perm = jnp.transpose(jnp.arange(3 * E).reshape(H, D, 3), (2, 0, 1)).reshape(3 * E)
    return {
        "w_qkv": params["w_qkv"][:, perm],
        "b_qkv": params["b_qkv"][perm],
        "w_proj": params["w_proj"] * jnp.asarray(inv_scaling,
                                                 params["w_proj"].dtype),
        "b_proj": params["b_proj"],
    }


def multi_head_attention(x, prepared, num_heads):
    """x: (B, N, E) -> (B, N, E). Mirrors the PyTorch MultiHeadAttention.
    `prepared` must come from prepare_params (one-time)."""
    B, N, E = x.shape

    # qkv projection: (B*N, E) @ (E, 3E) + b   (tiled / pipelined)
    x2d = x.reshape(B * N, E)
    qkv_out = linear_pallas(x2d, prepared["w_qkv"], prepared["b_qkv"])  # (B*N, 3E)
    qkv3 = qkv_out.reshape(B, N, 3 * E)                                 # free reshape

    # flash attention + in-kernel head merge -> (B, N, E), lane-dense output
    out = attention_pallas(qkv3, num_heads=num_heads)

    # output projection (1/sqrt(E) already folded into w_proj)
    out2d = linear_pallas(out.reshape(B * N, E),
                          prepared["w_proj"], prepared["b_proj"])
    return out2d.reshape(B, N, E)


# Pure-JAX reference (original interleaved 'b n (h d qkv)' interpretation).
def multi_head_attention_ref(x, params, num_heads):
    B, N, E = x.shape
    H = num_heads
    D = E // H
    scaling = float(E) ** 0.5
    qkv_out = x.reshape(B * N, E) @ params["w_qkv"] + params["b_qkv"]
    qkv = qkv_out.reshape(B, N, H, D, 3)
    qkv = jnp.transpose(qkv, (4, 0, 2, 1, 3))
    q, k, v = qkv[0], qkv[1], qkv[2]
    energy = jnp.einsum("bhqd,bhkd->bhqk", q, k)
    att = jax.nn.softmax(energy, axis=-1) / scaling
    out = jnp.einsum("bhal,bhlv->bhav", att, v)
    out = jnp.transpose(out, (0, 2, 1, 3)).reshape(B * N, E)
    out = out @ params["w_proj"] + params["b_proj"]
    return out.reshape(B, N, E)


# ----------------------------------------------------------------------------
# Main
# ----------------------------------------------------------------------------
if __name__ == "__main__":
    # Small shapes consistent with the module (emb divisible by num_heads;
    # emb chosen lane-aligned so the efficient column-block path is exercised).
    B, N, E, H = 2, 8, 128, 4

    key = jax.random.PRNGKey(0)
    k_x, k_wq, k_bq, k_wp, k_bp = jax.random.split(key, 5)

    x = jax.random.normal(k_x, (B, N, E), dtype=jnp.float32)

    # nn.Linear params stored pre-transposed as (in, out) for x @ W.
    params = {
        "w_qkv": jax.random.normal(k_wq, (E, 3 * E), dtype=jnp.float32) * 0.05,
        "b_qkv": jax.random.normal(k_bq, (3 * E,), dtype=jnp.float32) * 0.05,
        "w_proj": jax.random.normal(k_wp, (E, E), dtype=jnp.float32) * 0.05,
        "b_proj": jax.random.normal(k_bp, (E,), dtype=jnp.float32) * 0.05,
    }

    ref = jax.block_until_ready(multi_head_attention_ref(x, params, num_heads=H))

    # f32 path (approx-reciprocal softmax -> slightly looser than exact f32).
    prepared = prepare_params(params, num_heads=H)
    out = jax.block_until_ready(multi_head_attention(x, prepared, num_heads=H))
    assert out.shape == (B, N, E)
    assert jnp.allclose(out, ref, atol=2e-3, rtol=2e-3), "f32 mismatch vs reference"

    # bf16 path (MXU-friendly: bf16 inputs, f32 accumulation) -- loose check.
    x_bf = x.astype(jnp.bfloat16)
    params_bf = jax.tree_util.tree_map(lambda p: p.astype(jnp.bfloat16), params)
    prepared_bf = prepare_params(params_bf, num_heads=H)
    out_bf = jax.block_until_ready(
        multi_head_attention(x_bf, prepared_bf, num_heads=H))
    assert out_bf.shape == (B, N, E)
    assert jnp.allclose(out_bf.astype(jnp.float32), ref, atol=1e-1, rtol=1e-1), \
        "bf16 mismatch vs reference"

    print("KERNEL_OK")
</pallas_src>

<mosaic_0001>
module attributes {stable_mosaic.version = 11 : i64} {
  func.func @_linear_kernel(%arg0: i32, %arg1: i32, %arg2: i32, %arg3: memref<16x128xf32, #tpu.memory_space<vmem>>, %arg4: memref<128x384xf32, #tpu.memory_space<vmem>>, %arg5: memref<1x384xf32, #tpu.memory_space<vmem>>, %arg6: memref<16x384xf32, #tpu.memory_space<vmem>>, %arg7: memref<16x384xf32, #tpu.memory_space<vmem>>) attributes {dimension_semantics = [#tpu.dimension_semantics<parallel>, #tpu.dimension_semantics<parallel>, #tpu.dimension_semantics<arbitrary>], iteration_bounds = array<i64: 1, 1, 1>, scalar_prefetch = 0 : i64, scratch_operands = 1 : i64, tpu.core_type = #tpu.core_type<tc>, window_params = [{transform_indices = @transform_0, window_bounds = array<i64: 16, 128>}, {transform_indices = @transform_1, window_bounds = array<i64: 128, 384>}, {transform_indices = @transform_2, window_bounds = array<i64: 1, 384>}, {transform_indices = @transform_3, window_bounds = array<i64: 16, 384>}]} {
    %c0_i32 = arith.constant 0 : i32
    %0 = arith.cmpi eq, %arg2, %c0_i32 : i32
    %1 = arith.extui %0 : i1 to i32
    %c0_i32_0 = arith.constant 0 : i32
    %2 = arith.cmpi ne, %1, %c0_i32_0 : i32
    scf.if %2 {
      %cst_10 = arith.constant 0.000000e+00 : f32
      %12 = vector.broadcast %cst_10 : f32 to vector<16x384xf32>
      %c0_11 = arith.constant 0 : index
      %c0_12 = arith.constant 0 : index
      %13 = vector.load %arg7[%c0_11, %c0_12] : memref<16x384xf32, #tpu.memory_space<vmem>>, vector<16x384xf32>
      tpu.vector_store %arg7[%c0_11, %c0_12], %12 {strides = array<i32>} : memref<16x384xf32, #tpu.memory_space<vmem>>, vector<16x384xf32>,
    } else {
    }
    %c0 = arith.constant 0 : index
    %c0_1 = arith.constant 0 : index
    %3 = vector.load %arg7[%c0, %c0_1] : memref<16x384xf32, #tpu.memory_space<vmem>>, vector<16x384xf32>
    %c0_2 = arith.constant 0 : index
    %c0_3 = arith.constant 0 : index
    %4 = vector.load %arg3[%c0_2, %c0_3] : memref<16x128xf32, #tpu.memory_space<vmem>>, vector<16x128xf32>
    %c0_4 = arith.constant 0 : index
    %c0_5 = arith.constant 0 : index
    %5 = vector.load %arg4[%c0_4, %c0_5] : memref<128x384xf32, #tpu.memory_space<vmem>>, vector<128x384xf32>
    %cst = arith.constant dense<0.000000e+00> : vector<16x384xf32>
    %6 = tpu.matmul %4, %5, %cst {dimension_numbers = #tpu.dot_dimension_numbers<[1], [0], [0], [1], [0, 0, 1, 1], [], []>} : vector<16x128xf32>, vector<128x384xf32>, vector<16x384xf32> -> vector<16x384xf32>
    %7 = arith.addf %3, %6 : vector<16x384xf32>
    %c0_6 = arith.constant 0 : index
    %c0_7 = arith.constant 0 : index
    %8 = vector.load %arg7[%c0_6, %c0_7] : memref<16x384xf32, #tpu.memory_space<vmem>>, vector<16x384xf32>
    tpu.vector_store %arg7[%c0_6, %c0_7], %7 {strides = array<i32>} : memref<16x384xf32, #tpu.memory_space<vmem>>, vector<16x384xf32>,
    %c0_i32_8 = arith.constant 0 : i32
    %9 = arith.cmpi eq, %arg2, %c0_i32_8 : i32
    %10 = arith.extui %9 : i1 to i32
    %c0_i32_9 = arith.constant 0 : i32
    %11 = arith.cmpi ne, %10, %c0_i32_9 : i32
    scf.if %11 {
      %c0_10 = arith.constant 0 : index
      %c0_11 = arith.constant 0 : index
      %12 = vector.load %arg7[%c0_10, %c0_11] : memref<16x384xf32, #tpu.memory_space<vmem>>, vector<16x384xf32>
      %c0_12 = arith.constant 0 : index
      %c0_13 = arith.constant 0 : index
      %13 = vector.load %arg5[%c0_12, %c0_13] : memref<1x384xf32, #tpu.memory_space<vmem>>, vector<1x384xf32>
      %14 = vector.broadcast %13 : vector<1x384xf32> to vector<16x384xf32>
      %15 = arith.addf %12, %14 : vector<16x384xf32>
      %c0_14 = arith.constant 0 : index
      %c0_15 = arith.constant 0 : index
      %16 = vector.load %arg6[%c0_14, %c0_15] : memref<16x384xf32, #tpu.memory_space<vmem>>, vector<16x384xf32>
      tpu.vector_store %arg6[%c0_14, %c0_15], %15 {strides = array<i32>} : memref<16x384xf32, #tpu.memory_space<vmem>>, vector<16x384xf32>,
    } else {
    }
    return
  }
  func.func @transform_0(%arg0: i32, %arg1: i32, %arg2: i32) -> (i32, i32) {
    %c0_i32 = arith.constant 0 : i32
    return %arg0, %arg2 : i32, i32
  }
  func.func @transform_1(%arg0: i32, %arg1: i32, %arg2: i32) -> (i32, i32) {
    %c0_i32 = arith.constant 0 : i32
    return %arg2, %arg1 : i32, i32
  }
  func.func @transform_2(%arg0: i32, %arg1: i32, %arg2: i32) -> (i32, i32) {
    %c0_i32 = arith.constant 0 : i32
    %c0_i32_0 = arith.constant 0 : i32
    return %c0_i32, %arg1 : i32, i32
  }
  func.func @transform_3(%arg0: i32, %arg1: i32, %arg2: i32) -> (i32, i32) {
    %c0_i32 = arith.constant 0 : i32
    return %arg0, %arg1 : i32, i32
  }
}

</mosaic_0001>

<llo_original>
// kernel: tpu_custom_call.1
$region0: #{tpu_custom_call.1}
  #allocation0 [shape = 'u32[]', space=smem, size = 0x4, offset = 0x4, fixed_abs, tag = 'smem constant byte address 0x4 - core index']
  #allocation1 [shape = 'u32[144,128]{1,0:T(1,128)}', space=vmem, size = 0x12000, scoped, tag = 'internal scratch']
  #allocation2 [shape = 'f32[16,384]{1,0:T(8,128)}', space=vmem, size = 0x6000, scoped, tag = 'scratch operand']
  %s0 = inlined_call_operand.hbm [shape: f32[16,128], index: 0, kind: input, shape index: {}]
  %s1 = inlined_call_operand.hbm [shape: f32[128,384], index: 1, kind: input, shape index: {}]
  %s2 = inlined_call_operand.vmem [shape: f32[1,384], index: 2, kind: input, shape index: {}]
  %s3 = inlined_call_operand.hbm [shape: f32[16,384], index: 3, kind: output, shape index: {}]
  %s4 = sld [smem:[#allocation0]]
  $region38: #{tpu_custom_call.1} parent=0
    _
  %s6 = ssub.s32 1, %s4
  %s7 = scalar_select 0, %s6, %s4
  $region1: #{tpu_custom_call.1} parent=0
    #allocation3 [shape = 'u8[8192]{0}', space=vmem, size = 0x2000, scoped, tag = 'input window, operand 0, single buffered']
    #allocation4 [shape = 's32[1]{0}', space=sflag, size = 0x4, scoped, tag = 'scoped memory for tpu_custom_call.1']
    #allocation5 [shape = 's32[1]{0}', space=sflag, size = 0x4, scoped, tag = 'scoped memory for tpu_custom_call.1']
    #allocation6 [shape = 'u8[196608]{0}', space=vmem, size = 0x30000, scoped, tag = 'input window, operand 1, single buffered']
    #allocation7 [shape = 's32[1]{0}', space=sflag, size = 0x4, scoped, tag = 'scoped memory for tpu_custom_call.1']
    #allocation8 [shape = 'u8[24576]{0}', space=vmem, size = 0x6000, scoped, tag = 'output window, operand 0, single buffered']
    %8 = vsyncpa [#allocation4], 0
    %9 = vsyncpa [#allocation7], 0
    %10 = vsyncpa [#allocation5], 0
    // Predicated region
    $region2: #{tpu_custom_call.1} parent=1 // pred_check
      _
    $region3: #{tpu_custom_call.1} parent=1 // pred_check_branch
      %12 = sbr.rel (0) target = $region5
    $region4: #{tpu_custom_call.1} parent=1 // pred_region
      %s14 = ssub.s32 256, 256
      %15 = vsyncadd [#allocation4], %s14
      %s16 = sshll.u32 [#allocation3], 4
      %s17 = int_to_ptr.vmem [resolvable:$true] %s16
      %22 = dma.hbm_to_vmem [thread:$0]  %s0, 256, %s17, [#allocation4], 128, 128, 8
    $region5: #{tpu_custom_call.1} parent=1 // pred_fallthru
      _
    // Predicated region
    $region6: #{tpu_custom_call.1} parent=1 // pred_check
      _
    $region7: #{tpu_custom_call.1} parent=1 // pred_check_branch
      %24 = sbr.rel (0) target = $region9
    $region8: #{tpu_custom_call.1} parent=1 // pred_region
      %s26 = ssub.s32 6144, 6144
      %27 = vsyncadd [#allocation7], %s26
      %s28 = sshll.u32 [#allocation6], 4
      %s29 = int_to_ptr.vmem [resolvable:$true] %s28
      %34 = dma.hbm_to_vmem [thread:$0]  %s1, 6144, %s29, [#allocation7], 384, 384, 24
    $region9: #{tpu_custom_call.1} parent=1 // pred_fallthru
      _
    // Predicated region
    $region10: #{tpu_custom_call.1} parent=1 // pred_check
      _
    $region11: #{tpu_custom_call.1} parent=1 // pred_check_branch
      %36 = sbr.rel (0) target = $region13
    $region12: #{tpu_custom_call.1} parent=1 // pred_region
      _
    $region13: #{tpu_custom_call.1} parent=1 // pred_fallthru
      _
    // Predicated region
    $region14: #{tpu_custom_call.1} parent=1 // pred_check
      _
    $region15: #{tpu_custom_call.1} parent=1 // pred_check_branch
      %38 = sbr.rel (0) target = $region17
    $region16: #{tpu_custom_call.1} parent=1 // pred_region
      %39 = dma.done [#allocation4], 256
    $region17: #{tpu_custom_call.1} parent=1 // pred_fallthru
      _
    // Predicated region
    $region18: #{tpu_custom_call.1} parent=1 // pred_check
      _
    $region19: #{tpu_custom_call.1} parent=1 // pred_check_branch
      %41 = sbr.rel (0) target = $region21
    $region20: #{tpu_custom_call.1} parent=1 // pred_region
      %42 = dma.done [#allocation7], 6144
    $region21: #{tpu_custom_call.1} parent=1 // pred_fallthru
      _
    %p43 = scmp.eq.s32.totalorder 0, 0
    // Predicated region
    $region22: #{tpu_custom_call.1} parent=1 // pred_check
      %p44 = pneg %p43
    $region23: #{tpu_custom_call.1} parent=1 // pred_check_branch
      %46 = sbr.rel (%p44) target = $region25
    $region24: #{tpu_custom_call.1} parent=1 // pred_region
      %47 = vst [vmem:[#allocation2] sm:$0xff] 0.0
      %48 = vst [vmem:[#allocation2 + $0x8] sm:$0xff] 0.0
      %49 = vst [vmem:[#allocation2 + $0x10] sm:$0xff] 0.0
      %50 = vst [vmem:[#allocation2 + $0x18] sm:$0xff] 0.0
      %51 = vst [vmem:[#allocation2 + $0x20] sm:$0xff] 0.0
      %52 = vst [vmem:[#allocation2 + $0x28] sm:$0xff] 0.0
    $region25: #{tpu_custom_call.1} parent=1 // pred_fallthru
      _
    %v53 = vld [vmem:[#allocation2] sm:$0xff]
    %v54 = vld [vmem:[#allocation2 + $0x8] sm:$0xff]
    %v55 = vld [vmem:[#allocation2 + $0x10] sm:$0xff]
    %v56 = vld [vmem:[#allocation2 + $0x18] sm:$0xff]
    %v57 = vld [vmem:[#allocation2 + $0x20] sm:$0xff]
    %v58 = vld [vmem:[#allocation2 + $0x28] sm:$0xff]
    %v59 = vld [vmem:[#allocation3] sm:$0xff]
    %v60 = vld [vmem:[#allocation3 + $0x8] sm:$0xff]
    %v61 = vld [vmem:[#allocation6] sm:$0xff]
    %v62 = vld [vmem:[#allocation6 + $0x8] sm:$0xff]
    %v63 = vld [vmem:[#allocation6 + $0x10] sm:$0xff]
    %v64 = vld [vmem:[#allocation6 + $0x18] sm:$0xff]
    %v65 = vld [vmem:[#allocation6 + $0x20] sm:$0xff]
    %v66 = vld [vmem:[#allocation6 + $0x28] sm:$0xff]
    %v67 = vld [vmem:[#allocation6 + $0x30] sm:$0xff]
    %v68 = vld [vmem:[#allocation6 + $0x38] sm:$0xff]
    %v69 = vld [vmem:[#allocation6 + $0x40] sm:$0xff]
    %v70 = vld [vmem:[#allocation6 + $0x48] sm:$0xff]
    %v71 = vld [vmem:[#allocation6 + $0x50] sm:$0xff]
    %v72 = vld [vmem:[#allocation6 + $0x58] sm:$0xff]
    %v73 = vld [vmem:[#allocation6 + $0x60] sm:$0xff]
    %v74 = vld [vmem:[#allocation6 + $0x68] sm:$0xff]
    %v75 = vld [vmem:[#allocation6 + $0x70] sm:$0xff]
    %v76 = vld [vmem:[#allocation6 + $0x78] sm:$0xff]
    %v77 = vld [vmem:[#allocation6 + $0x80] sm:$0xff]
    %v78 = vld [vmem:[#allocation6 + $0x88] sm:$0xff]
    %v79 = vld [vmem:[#allocation6 + $0x90] sm:$0xff]
    %v80 = vld [vmem:[#allocation6 + $0x98] sm:$0xff]
    %v81 = vld [vmem:[#allocation6 + $0xa0] sm:$0xff]
    %v82 = vld [vmem:[#allocation6 + $0xa8] sm:$0xff]
    %v83 = vld [vmem:[#allocation6 + $0xb0] sm:$0xff]
    %v84 = vld [vmem:[#allocation6 + $0xb8] sm:$0xff]
    %v85 = vld [vmem:[#allocation6 + $0xc0] sm:$0xff]
    %v86 = vld [vmem:[#allocation6 + $0xc8] sm:$0xff]
    %v87 = vld [vmem:[#allocation6 + $0xd0] sm:$0xff]
    %v88 = vld [vmem:[#allocation6 + $0xd8] sm:$0xff]
    %v89 = vld [vmem:[#allocation6 + $0xe0] sm:$0xff]
    %v90 = vld [vmem:[#allocation6 + $0xe8] sm:$0xff]
    %v91 = vld [vmem:[#allocation6 + $0xf0] sm:$0xff]
    %v92 = vld [vmem:[#allocation6 + $0xf8] sm:$0xff]
    %v93 = vld [vmem:[#allocation6 + $0x100] sm:$0xff]
    %v94 = vld [vmem:[#allocation6 + $0x108] sm:$0xff]
    %v95 = vld [vmem:[#allocation6 + $0x110] sm:$0xff]
    %v96 = vld [vmem:[#allocation6 + $0x118] sm:$0xff]
    %v97 = vld [vmem:[#allocation6 + $0x120] sm:$0xff]
    %v98 = vld [vmem:[#allocation6 + $0x128] sm:$0xff]
    %v99 = vld [vmem:[#allocation6 + $0x130] sm:$0xff]
    %v100 = vld [vmem:[#allocation6 + $0x138] sm:$0xff]
    %v101 = vld [vmem:[#allocation6 + $0x140] sm:$0xff]
    %v102 = vld [vmem:[#allocation6 + $0x148] sm:$0xff]
    %v103 = vld [vmem:[#allocation6 + $0x150] sm:$0xff]
    %v104 = vld [vmem:[#allocation6 + $0x158] sm:$0xff]
    %v105 = vld [vmem:[#allocation6 + $0x160] sm:$0xff]
    %v106 = vld [vmem:[#allocation6 + $0x168] sm:$0xff]
    %v107 = vld [vmem:[#allocation6 + $0x170] sm:$0xff]
    %v108 = vld [vmem:[#allocation6 + $0x178] sm:$0xff]
    %109 = vmatprep.subr.mxu0 %v62
    %110 = vmatpush1.msra.mxu0 %v61
    %111 = vmatprep.subr.mxu0 %v65
    %112 = vmatpush1.msra.mxu0 %v64
    %113 = vmatprep.subr.mxu0 %v68
    %114 = vmatpush1.msra.mxu0 %v67
    %115 = vmatprep.subr.mxu0 %v71
    %116 = vmatpush1.msra.mxu0 %v70
    %117 = vmatprep.subr.mxu0 %v74
    %118 = vmatpush1.msra.mxu0 %v73
    %119 = vmatprep.subr.mxu0 %v77
    %120 = vmatpush1.msra.mxu0 %v76
    %121 = vmatprep.subr.mxu0 %v80
    %122 = vmatpush1.msra.mxu0 %v79
    %123 = vmatprep.subr.mxu0 %v83
    %124 = vmatpush1.msra.mxu0 %v82
    %125 = vmatprep.subr.mxu0 %v86
    %126 = vmatpush1.msra.mxu0 %v85
    %127 = vmatprep.subr.mxu0 %v89
    %128 = vmatpush1.msra.mxu0 %v88
    %129 = vmatprep.subr.mxu0 %v92
    %130 = vmatpush1.msra.mxu0 %v91
    %131 = vmatprep.subr.mxu0 %v95
    %132 = vmatpush1.msra.mxu0 %v94
    %133 = vmatprep.subr.mxu0 %v98
    %134 = vmatpush1.msra.mxu0 %v97
    %135 = vmatprep.subr.mxu0 %v101
    %136 = vmatpush1.msra.mxu0 %v100
    %137 = vmatprep.subr.mxu0 %v104
    %138 = vmatpush1.msra.mxu0 %v103
    %139 = vmatprep.subr.mxu0 %v107
    %140 = vmatpush1.msra.mxu0 %v106
    %141 = vmatprep.subr.mxu0 0.0
    %142 = vmatpush1.msra.mxu0 0.0
    %143 = vmatprep.subr.mxu0 0.0
    %144 = vmatpush1.msra.mxu0 0.0
    %145 = vmatprep.subr.mxu0 0.0
    %146 = vmatpush1.msra.mxu0 0.0
    %147 = vmatprep.subr.mxu0 0.0
    %148 = vmatpush1.msra.mxu0 0.0
    %149 = vmatprep.subr.mxu0 0.0
    %150 = vmatpush1.msra.mxu0 0.0
    %151 = vmatprep.subr.mxu0 0.0
    %152 = vmatpush1.msra.mxu0 0.0
    %153 = vmatprep.subr.mxu0 0.0
    %154 = vmatpush1.msra.mxu0 0.0
    %155 = vmatprep.subr.mxu0 0.0
    %156 = vmatpush1.msra.mxu0 0.0
    %157 = vmatprep.subr.mxu0 0.0
    %158 = vmatpush1.msra.mxu0 0.0
    %159 = vmatprep.subr.mxu0 0.0
    %160 = vmatpush1.msra.mxu0 0.0
    %161 = vmatprep.subr.mxu0 0.0
    %162 = vmatpush1.msra.mxu0 0.0
    %163 = vmatprep.subr.mxu0 0.0
    %164 = vmatpush1.msra.mxu0 0.0
    %165 = vmatprep.subr.mxu0 0.0
    %166 = vmatpush1.msra.mxu0 0.0
    %167 = vmatprep.subr.mxu0 0.0
    %168 = vmatpush1.msra.mxu0 0.0
    %169 = vmatprep.subr.mxu0 0.0
    %170 = vmatpush1.msra.mxu0 0.0
    %171 = vmatprep.subr.mxu0 0.0
    %172 = vmatpush1.msra.mxu0 0.0
    %173 = vmatprep.mubr.f32.mxu0 0.0
    %174 = vmatmul.mubr.f32.gmra.mrb[0].mxu0 %v59
    %v175 = vpop.f32.mrb[0].mxu0
    %v176 = vadd.f32 0.0, %v175
    %v177 = vpop.f32.mrb[0].mxu0
    %v178 = vadd.f32 0.0, %v177
    %179 = vmatprep.mubr.f32.mxu0 0.0
    %180 = vmatmul.mubr.f32.gmra.mrb[0].mxu0 %v60
    %v181 = vpop.f32.mrb[0].mxu0
    %v182 = vadd.f32 0.0, %v181
    %v183 = vpop.f32.mrb[0].mxu0
    %v184 = vadd.f32 0.0, %v183
    %185 = vdwg.mxu0
    %186 = vmatprep.subr.mxu0 0.0
    %187 = vmatpush1.msra.mxu0 %v63
    %188 = vmatprep.subr.mxu0 0.0
    %189 = vmatpush1.msra.mxu0 %v66
    %190 = vmatprep.subr.mxu0 0.0
    %191 = vmatpush1.msra.mxu0 %v69
    %192 = vmatprep.subr.mxu0 0.0
    %193 = vmatpush1.msra.mxu0 %v72
    %194 = vmatprep.subr.mxu0 0.0
    %195 = vmatpush1.msra.mxu0 %v75
    %196 = vmatprep.subr.mxu0 0.0
    %197 = vmatpush1.msra.mxu0 %v78
    %198 = vmatprep.subr.mxu0 0.0
    %199 = vmatpush1.msra.mxu0 %v81
    %200 = vmatprep.subr.mxu0 0.0
    %201 = vmatpush1.msra.mxu0 %v84
    %202 = vmatprep.subr.mxu0 0.0
    %203 = vmatpush1.msra.mxu0 %v87
    %204 = vmatprep.subr.mxu0 0.0
    %205 = vmatpush1.msra.mxu0 %v90
    %206 = vmatprep.subr.mxu0 0.0
    %207 = vmatpush1.msra.mxu0 %v93
    %208 = vmatprep.subr.mxu0 0.0
    %209 = vmatpush1.msra.mxu0 %v96
    %210 = vmatprep.subr.mxu0 0.0
    %211 = vmatpush1.msra.mxu0 %v99
    %212 = vmatprep.subr.mxu0 0.0
    %213 = vmatpush1.msra.mxu0 %v102
    %214 = vmatprep.subr.mxu0 0.0
    %215 = vmatpush1.msra.mxu0 %v105
    %216 = vmatprep.subr.mxu0 0.0
    %217 = vmatpush1.msra.mxu0 %v108
    %218 = vmatprep.subr.mxu0 0.0
    %219 = vmatpush1.msra.mxu0 0.0
    %220 = vmatprep.subr.mxu0 0.0
    %221 = vmatpush1.msra.mxu0 0.0
    %222 = vmatprep.subr.mxu0 0.0
    %223 = vmatpush1.msra.mxu0 0.0
    %224 = vmatprep.subr.mxu0 0.0
    %225 = vmatpush1.msra.mxu0 0.0
    %226 = vmatprep.subr.mxu0 0.0
    %227 = vmatpush1.msra.mxu0 0.0
    %228 = vmatprep.subr.mxu0 0.0
    %229 = vmatpush1.msra.mxu0 0.0
    %230 = vmatprep.subr.mxu0 0.0
    %231 = vmatpush1.msra.mxu0 0.0
    %232 = vmatprep.subr.mxu0 0.0
    %233 = vmatpush1.msra.mxu0 0.0
    %234 = vmatprep.subr.mxu0 0.0
    %235 = vmatpush1.msra.mxu0 0.0
    %236 = vmatprep.subr.mxu0 0.0
    %237 = vmatpush1.msra.mxu0 0.0
    %238 = vmatprep.subr.mxu0 0.0
    %239 = vmatpush1.msra.mxu0 0.0
    %240 = vmatprep.subr.mxu0 0.0
    %241 = vmatpush1.msra.mxu0 0.0
    %242 = vmatprep.subr.mxu0 0.0
    %243 = vmatpush1.msra.mxu0 0.0
    %244 = vmatprep.subr.mxu0 0.0
    %245 = vmatpush1.msra.mxu0 0.0
    %246 = vmatprep.subr.mxu0 0.0
    %247 = vmatpush1.msra.mxu0 0.0
    %248 = vmatprep.subr.mxu0 0.0
    %249 = vmatpush1.msra.mxu0 0.0
    %250 = vmatprep.mubr.f32.mxu0 0.0
    %251 = vmatmul.mubr.f32.gmra.mrb[0].mxu0 %v59
    %v252 = vpop.f32.mrb[0].mxu0
    %v253 = vadd.f32 0.0, %v252
    %v254 = vpop.f32.mrb[0].mxu0
    %255 = vmatprep.mubr.f32.mxu0 0.0
    %256 = vmatmul.mubr.f32.gmra.mrb[0].mxu0 %v60
    %v257 = vpop.f32.mrb[0].mxu0
    %v258 = vadd.f32 0.0, %v257
    %v259 = vpop.f32.mrb[0].mxu0
    %260 = vdwg.mxu0
    %v261 = vadd.f32 %v53, %v176
    %v262 = vadd.f32 %v54, %v178
    %v263 = vadd.f32 %v55, %v253
    %v264 = vadd.f32 %v56, %v182
    %v265 = vadd.f32 %v57, %v184
    %v266 = vadd.f32 %v58, %v258
    %267 = vst [vmem:[#allocation2] sm:$0xff] %v261
    %268 = vst [vmem:[#allocation2 + $0x8] sm:$0xff] %v262
    %269 = vst [vmem:[#allocation2 + $0x10] sm:$0xff] %v263
    %270 = vst [vmem:[#allocation2 + $0x18] sm:$0xff] %v264
    %271 = vst [vmem:[#allocation2 + $0x20] sm:$0xff] %v265
    %272 = vst [vmem:[#allocation2 + $0x28] sm:$0xff] %v266
    // Predicated region
    $region26: #{tpu_custom_call.1} parent=1 // pred_check
      %p273 = pneg %p43
    $region27: #{tpu_custom_call.1} parent=1 // pred_check_branch
      %275 = sbr.rel (%p273) target = $region29
    $region28: #{tpu_custom_call.1} parent=1 // pred_region
      %v276 = vld [vmem:[#allocation2] sm:$0xff]
      %v277 = vld [vmem:[#allocation2 + $0x8] sm:$0xff]
      %v278 = vld [vmem:[#allocation2 + $0x10] sm:$0xff]
      %v279 = vld [vmem:[#allocation2 + $0x18] sm:$0xff]
      %v280 = vld [vmem:[#allocation2 + $0x20] sm:$0xff]
      %v281 = vld [vmem:[#allocation2 + $0x28] sm:$0xff]
      %v282 = vld [vmem:[%s2] sm:$0x7]
      %v284 = vlaneseq
      %v285 = vshrl.u32 %v284, 7
      %v286 = vsub.s32 0, %v285
      %v287 = vrot.slane %v282, %v286
      %v288 = vlaneseq
      %v289 = vshrl.u32 %v288, 7
      %v290 = vsub.s32 1, %v289
      %v291 = vrot.slane %v282, %v290
      %v292 = vlaneseq
      %v293 = vshrl.u32 %v292, 7
      %v294 = vsub.s32 2, %v293
      %v295 = vrot.slane %v282, %v294
      %v299 = vadd.f32 %v276, %v287
      %v300 = vadd.f32 %v277, %v291
      %v301 = vadd.f32 %v278, %v295
      %v302 = vadd.f32 %v279, %v287
      %v303 = vadd.f32 %v280, %v291
      %v304 = vadd.f32 %v281, %v295
      %305 = vst [vmem:[#allocation8] sm:$0xff] %v299
      %306 = vst [vmem:[#allocation8 + $0x8] sm:$0xff] %v300
      %307 = vst [vmem:[#allocation8 + $0x10] sm:$0xff] %v301
      %308 = vst [vmem:[#allocation8 + $0x18] sm:$0xff] %v302
      %309 = vst [vmem:[#allocation8 + $0x20] sm:$0xff] %v303
      %310 = vst [vmem:[#allocation8 + $0x28] sm:$0xff] %v304
    $region29: #{tpu_custom_call.1} parent=1 // pred_fallthru
      _
    // Predicated region
    $region30: #{tpu_custom_call.1} parent=1 // pred_check
      _
    $region31: #{tpu_custom_call.1} parent=1 // pred_check_branch
      %312 = sbr.rel (0) target = $region33
    $region32: #{tpu_custom_call.1} parent=1 // pred_region
      %s314 = ssub.s32 768, 768
      %315 = vsyncadd [#allocation5], %s314
      %s316 = sshll.u32 [#allocation8], 4
      %s317 = int_to_ptr.vmem [resolvable:$true] %s316
      %322 = dma.vmem_to_hbm [thread:$0]  %s317, 768, %s3, [#allocation5], 384, 384, 24
    $region33: #{tpu_custom_call.1} parent=1 // pred_fallthru
      _
    // Predicated region
    $region34: #{tpu_custom_call.1} parent=1 // pred_check
      _
    $region35: #{tpu_custom_call.1} parent=1 // pred_check_branch
      %324 = sbr.rel (0) target = $region37
    $region36: #{tpu_custom_call.1} parent=1 // pred_region
      %325 = dma.done [#allocation5], 768
    $region37: #{tpu_custom_call.1} parent=1 // pred_fallthru
      _
    %326 = vsyncpa [#allocation4], 1
    %327 = vsyncpa [#allocation7], 1
    %328 = vsyncpa [#allocation5], 1

</llo_original>
